<compile_context>
chip_gen: v6e
topology: v6e:2x2x1
jax: 0.10.0
libtpu: 0.0.40
codegen_flags: <defaults>
</compile_context>

<pallas_src>
import jax
import jax.numpy as jnp
from jax.experimental import pallas as pl
from jax.experimental.pallas import tpu as pltpu

EPS = 1e-5
LANE = 128


def _round_up(v, m):
    return (v + m - 1) // m * m


def _conv3x3_matmul(h_bf16, w_flat_ref):
    """3x3 'same' conv on one image as a single im2col MXU matmul.

    h_bf16     : (H, W, C) bf16 activation (C is a multiple of 128 -> lane dense)
    w_flat_ref : (9*C, Cout) bf16 weight ref, rows ordered (dy, dx, cin)
    returns    : (H*W, Cout) f32
    """
    H, W, C = h_bf16.shape
    zrow = jnp.zeros((1, W, C), jnp.bfloat16)
    zcol = jnp.zeros((H + 2, 1, C), jnp.bfloat16)
    hp = jnp.concatenate([zrow, h_bf16, zrow], axis=0)        # (H+2, W,   C)
    hp = jnp.concatenate([zcol, hp, zcol], axis=1)            # (H+2, W+2, C)
    cols = []
    for dy in range(3):
        for dx in range(3):
            cols.append(hp[dy:dy + H, dx:dx + W, :].reshape(H * W, C))
    patches = jnp.concatenate(cols, axis=1)                   # (H*W, 9*C), lane dense
    return jnp.dot(patches, w_flat_ref[...],
                   preferred_element_type=jnp.float32)


# --------------------------- kernels ---------------------------------------
def _stats_kernel(x_ref, stat_ref):
    """Per-image partial per-channel sum / sum-of-squares of x (for BN1)."""
    _, H, W, C = x_ref.shape
    xf = x_ref[0].reshape(H * W, C)
    ssum = jnp.sum(xf, axis=0, keepdims=True)
    ssq = jnp.sum(xf * xf, axis=0, keepdims=True)
    stat_ref[0] = jnp.concatenate(
        [ssum, ssq, jnp.zeros((6, C), jnp.float32)], axis=0)


def _bn_conv1_kernel(x_ref, scale1_ref, shift1_ref, w1_ref, y1_ref, stat_ref):
    """ReLU(BN1(x)) -> conv1(3x3); also emits partial stats of y1 for BN2."""
    _, H, W, _ = x_ref.shape
    Cout = y1_ref.shape[-1]
    # BN1 + ReLU with precomputed per-channel scale/shift (f32, VPU).
    h1 = jnp.maximum(x_ref[0] * scale1_ref[...] + shift1_ref[...], 0.0)
    # conv1 as one bf16 MXU matmul, f32 accumulate. (b1 omitted: it is exactly
    # cancelled by BN2's per-channel mean subtraction.)
    y1 = _conv3x3_matmul(h1.astype(jnp.bfloat16), w1_ref)     # (H*W, Cout) f32
    y1_ref[0] = y1.reshape(H, W, Cout)
    # single-pass partial stats of y1 (sum + sumsq) for BN2.
    ssum = jnp.sum(y1, axis=0, keepdims=True)
    ssq = jnp.sum(y1 * y1, axis=0, keepdims=True)
    stat_ref[0] = jnp.concatenate(
        [ssum, ssq, jnp.zeros((6, Cout), jnp.float32)], axis=0)


def _bn_conv2_skip_kernel(x_ref, y1_ref, scale2_ref, shift2_ref,
                          w2_ref, ws_ref, bias_ref, o_ref):
    """ReLU(BN2(y1)) -> conv2(3x3), plus 1x1 skip conv on x, fused add."""
    _, H, W, Cin = x_ref.shape
    Cout = o_ref.shape[-1]
    h2 = jnp.maximum(y1_ref[0] * scale2_ref[...] + shift2_ref[...], 0.0)
    y2 = _conv3x3_matmul(h2.astype(jnp.bfloat16), w2_ref)     # (H*W, Cout) f32
    xf = x_ref[0].reshape(H * W, Cin).astype(jnp.bfloat16)
    s = jnp.dot(xf, ws_ref[...], preferred_element_type=jnp.float32)
    o_ref[0] = (y2 + s + bias_ref[...]).reshape(H, W, Cout)


# --------------------------- wrapper ----------------------------------------
def residual_block_pallas(x_nchw, params):
    """params hold PyTorch-convention tensors (OIHW conv weights, 1-D bn params)."""
    N, Cin, H, W = x_nchw.shape
    Cout = params["w1"].shape[0]
    Cinp = _round_up(Cin, LANE)
    Coutp = _round_up(Cout, LANE)
    M = N * H * W

    # ---- layout plumbing: NCHW -> NHWC, channels padded to lane width -------
    x = jnp.transpose(x_nchw, (0, 2, 3, 1)).astype(jnp.float32)
    x = jnp.pad(x, ((0, 0), (0, 0), (0, 0), (0, Cinp - Cin)))

    def pad_vec(v, c, cp):
        return jnp.pad(v.astype(jnp.float32), (0, cp - c)).reshape(1, cp)

    def conv_w_flat(w_oihw, ci, cip, co, cop):
        w = jnp.transpose(w_oihw, (2, 3, 1, 0))               # (3,3,ci,co) HWIO
        w = jnp.pad(w, ((0, 0), (0, 0), (0, cip - ci), (0, cop - co)))
        return w.reshape(9 * cip, cop).astype(jnp.bfloat16)   # rows = (dy,dx,cin)

    w1 = conv_w_flat(params["w1"], Cin, Cinp, Cout, Coutp)
    w2 = conv_w_flat(params["w2"], Cout, Coutp, Cout, Coutp)
    ws = jnp.pad(jnp.transpose(params["ws"][:, :, 0, 0], (1, 0)),
                 ((0, Cinp - Cin), (0, Coutp - Cout))).astype(jnp.bfloat16)

    g1 = pad_vec(params["g1"], Cin, Cinp)
    be1 = pad_vec(params["be1"], Cin, Cinp)
    g2 = pad_vec(params["g2"], Cout, Coutp)
    be2 = pad_vec(params["be2"], Cout, Coutp)
    # b1 cancelled by BN2; b2 and bs folded into a single final bias.
    bias = pad_vec(params["b2"] + params["bs"], Cout, Coutp)

    x_spec = pl.BlockSpec((1, H, W, Cinp), lambda n: (n, 0, 0, 0))
    y1_spec = pl.BlockSpec((1, H, W, Coutp), lambda n: (n, 0, 0, 0))

    def stat_spec(c):
        return pl.BlockSpec((1, 8, c), lambda n: (n, 0, 0))

    def vec_spec(c):
        return pl.BlockSpec((1, c), lambda n: (0, 0))

    def mat_spec(r, c):
        return pl.BlockSpec((r, c), lambda n: (0, 0))

    parallel = pltpu.CompilerParams(dimension_semantics=("parallel",))

    # finalize BN stats (tiny per-channel math on (1, C) vectors).
    def bn_scale_shift(stat, gamma, beta):
        s = jnp.sum(stat, axis=0)                             # (8, C)
        mean = s[0] / M
        var = jnp.maximum(s[1] / M - mean * mean, 0.0)
        inv = gamma[0] * jax.lax.rsqrt(var + EPS)
        return inv.reshape(1, -1), (beta[0] - mean * inv).reshape(1, -1)

    # ---- phase 1: per-channel stats of x (BN1) ------------------------------
    stats1 = pl.pallas_call(
        _stats_kernel,
        grid=(N,),
        in_specs=[x_spec],
        out_specs=stat_spec(Cinp),
        out_shape=jax.ShapeDtypeStruct((N, 8, Cinp), jnp.float32),
        compiler_params=parallel,
    )(x)
    scale1, shift1 = bn_scale_shift(stats1, g1, be1)

    # ---- phase 2: BN1+ReLU -> conv1 (+ partial stats of y1) -----------------
    y1, stats2 = pl.pallas_call(
        _bn_conv1_kernel,
        grid=(N,),
        in_specs=[x_spec, vec_spec(Cinp), vec_spec(Cinp),
                  mat_spec(9 * Cinp, Coutp)],
        out_specs=(y1_spec, stat_spec(Coutp)),
        out_shape=(jax.ShapeDtypeStruct((N, H, W, Coutp), jnp.float32),
                   jax.ShapeDtypeStruct((N, 8, Coutp), jnp.float32)),
        compiler_params=parallel,
        cost_estimate=pl.CostEstimate(
            flops=2 * M * (9 * Cinp) * Coutp,
            transcendentals=0,
            bytes_accessed=x.size * 4 + M * Coutp * 4 + w1.size * 2),
    )(x, scale1, shift1, w1)
    scale2, shift2 = bn_scale_shift(stats2, g2, be2)

    # ---- phase 3: BN2+ReLU -> conv2, 1x1 skip conv, fused add ---------------
    out = pl.pallas_call(
        _bn_conv2_skip_kernel,
        grid=(N,),
        in_specs=[x_spec, y1_spec, vec_spec(Coutp), vec_spec(Coutp),
                  mat_spec(9 * Coutp, Coutp), mat_spec(Cinp, Coutp),
                  vec_spec(Coutp)],
        out_specs=pl.BlockSpec((1, H, W, Coutp), lambda n: (n, 0, 0, 0)),
        out_shape=jax.ShapeDtypeStruct((N, H, W, Coutp), jnp.float32),
        compiler_params=parallel,
        cost_estimate=pl.CostEstimate(
            flops=2 * M * (9 * Coutp) * Coutp + 2 * M * Cinp * Coutp,
            transcendentals=0,
            bytes_accessed=(x.size + 2 * M * Coutp) * 4
                           + (w2.size + ws.size) * 2),
    )(x, y1, scale2, shift2, w2, ws, bias)

    out = out[..., :Cout]                                     # drop lane padding
    return jnp.transpose(out, (0, 3, 1, 2))                   # NHWC -> NCHW


# ----------------------- pure-JAX reference (for checking) ------------------
def _ref_forward(x, p):
    def bn_relu(h, g, b):
        mean = jnp.mean(h, axis=(0, 2, 3), keepdims=True)
        var = jnp.mean((h - mean) ** 2, axis=(0, 2, 3), keepdims=True)
        hhat = (h - mean) / jnp.sqrt(var + EPS)
        return jnp.maximum(hhat * g[None, :, None, None] + b[None, :, None, None], 0.0)

    def conv(h, w, b, pad):
        y = jax.lax.conv_general_dilated(
            h, w, (1, 1), [(pad, pad), (pad, pad)],
            dimension_numbers=("NCHW", "OIHW", "NCHW"))
        return y + b[None, :, None, None]

    h = bn_relu(x, p["g1"], p["be1"])
    h = conv(h, p["w1"], p["b1"], pad=1)
    h = bn_relu(h, p["g2"], p["be2"])
    h = conv(h, p["w2"], p["b2"], pad=1)
    s = conv(x, p["ws"], p["bs"], pad=0)
    return h + s


if __name__ == "__main__":
    N, Cin, Cout, H, W = 2, 4, 8, 16, 16

    key = jax.random.PRNGKey(0)
    ks = jax.random.split(key, 12)
    params = {
        "w1": 0.1 * jax.random.normal(ks[0], (Cout, Cin, 3, 3), jnp.float32),
        "b1": 0.1 * jax.random.normal(ks[1], (Cout,), jnp.float32),
        "w2": 0.1 * jax.random.normal(ks[2], (Cout, Cout, 3, 3), jnp.float32),
        "b2": 0.1 * jax.random.normal(ks[3], (Cout,), jnp.float32),
        "ws": 0.1 * jax.random.normal(ks[4], (Cout, Cin, 1, 1), jnp.float32),
        "bs": 0.1 * jax.random.normal(ks[5], (Cout,), jnp.float32),
        "g1": 1.0 + 0.1 * jax.random.normal(ks[6], (Cin,), jnp.float32),
        "be1": 0.1 * jax.random.normal(ks[7], (Cin,), jnp.float32),
        "g2": 1.0 + 0.1 * jax.random.normal(ks[8], (Cout,), jnp.float32),
        "be2": 0.1 * jax.random.normal(ks[9], (Cout,), jnp.float32),
    }
    x = jax.random.normal(ks[10], (N, Cin, H, W), jnp.float32)

    out = jax.block_until_ready(residual_block_pallas(x, params))
    ref = jax.block_until_ready(_ref_forward(x, params))

    assert out.shape == (N, Cout, H, W), out.shape
    # Tolerance accounts for bf16 MXU matmul inputs (f32 accumulation) vs the
    # pure-f32 reference.
    assert jnp.allclose(out, ref, rtol=3e-2, atol=3e-2), \
        float(jnp.max(jnp.abs(out - ref)))
    print("KERNEL_OK")
</pallas_src>

<mosaic_0001>
module attributes {stable_mosaic.version = 11 : i64} {
  func.func @_stats_kernel(%arg0: i32, %arg1: memref<1x16x16x128xf32, #tpu.memory_space<vmem>>, %arg2: memref<1x8x128xf32, #tpu.memory_space<vmem>>) attributes {dimension_semantics = [#tpu.dimension_semantics<parallel>], iteration_bounds = array<i64: 2>, scalar_prefetch = 0 : i64, scratch_operands = 0 : i64, tpu.core_type = #tpu.core_type<tc>, window_params = [{transform_indices = @transform_0, window_bounds = array<i64: 1, 16, 16, 128>}, {transform_indices = @transform_1, window_bounds = array<i64: 1, 8, 128>}]} {
    %c0 = arith.constant 0 : index
    %c0_0 = arith.constant 0 : index
    %c0_1 = arith.constant 0 : index
    %c0_2 = arith.constant 0 : index
    %0 = vector.load %arg1[%c0, %c0_0, %c0_1, %c0_2] : memref<1x16x16x128xf32, #tpu.memory_space<vmem>>, vector<1x16x16x128xf32>
    %1 = vector.shape_cast %0 : vector<1x16x16x128xf32> to vector<16x16x128xf32>
    %2 = vector.shape_cast %1 : vector<16x16x128xf32> to vector<256x128xf32>
    %cst = arith.constant dense<0.000000e+00> : vector<128xf32>
    %3 = vector.multi_reduction <add>, %2, %cst [0] : vector<256x128xf32> to vector<128xf32>
    %4 = vector.shape_cast %3 : vector<128xf32> to vector<1x128xf32>
    %5 = arith.mulf %2, %2 : vector<256x128xf32>
    %cst_3 = arith.constant dense<0.000000e+00> : vector<128xf32>
    %6 = vector.multi_reduction <add>, %5, %cst_3 [0] : vector<256x128xf32> to vector<128xf32>
    %7 = vector.shape_cast %6 : vector<128xf32> to vector<1x128xf32>
    %cst_4 = arith.constant 0.000000e+00 : f32
    %8 = vector.broadcast %cst_4 : f32 to vector<6x128xf32>
    %9 = tpu.concatenate %4, %7, %8 in 0 : vector<1x128xf32>, vector<1x128xf32>, vector<6x128xf32> -> vector<8x128xf32>
    %c0_5 = arith.constant 0 : index
    %c0_6 = arith.constant 0 : index
    %c0_7 = arith.constant 0 : index
    %10 = vector.load %arg2[%c0_5, %c0_6, %c0_7] : memref<1x8x128xf32, #tpu.memory_space<vmem>>, vector<1x8x128xf32>
    %11 = vector.shape_cast %10 : vector<1x8x128xf32> to vector<8x128xf32>
    %12 = vector.shape_cast %9 : vector<8x128xf32> to vector<1x8x128xf32>
    tpu.vector_store %arg2[%c0_5, %c0_6, %c0_7], %12 {strides = array<i32>} : memref<1x8x128xf32, #tpu.memory_space<vmem>>, vector<1x8x128xf32>,
    return
  }
  func.func @transform_0(%arg0: i32) -> (i32, i32, i32, i32) {
    %c0_i32 = arith.constant 0 : i32
    %c0_i32_0 = arith.constant 0 : i32
    %c0_i32_1 = arith.constant 0 : i32
    %c0_i32_2 = arith.constant 0 : i32
    return %arg0, %c0_i32, %c0_i32_0, %c0_i32_1 : i32, i32, i32, i32
  }
  func.func @transform_1(%arg0: i32) -> (i32, i32, i32) {
    %c0_i32 = arith.constant 0 : i32
    %c0_i32_0 = arith.constant 0 : i32
    %c0_i32_1 = arith.constant 0 : i32
    return %arg0, %c0_i32, %c0_i32_0 : i32, i32, i32
  }
}

</mosaic_0001>

<llo_original>
// kernel: tpu_custom_call.1
$region0: #{tpu_custom_call.1}
  #allocation0 [shape = 'u32[]', space=smem, size = 0x4, offset = 0x4, fixed_abs, tag = 'smem constant byte address 0x4 - core index']
  #allocation1 [shape = 'u32[144,128]{1,0:T(1,128)}', space=vmem, size = 0x12000, scoped, tag = 'internal scratch']
  %s0 = inlined_call_operand.hbm [shape: f32[2,16,16,128], index: 0, kind: input, shape index: {}]
  %s1 = inlined_call_operand.hbm [shape: f32[2,8,128], index: 1, kind: output, shape index: {}]
  %s2 = sld [smem:[#allocation0]]
  $region41: #{tpu_custom_call.1} parent=0
    _
  %s4 = ssub.s32 1, %s2
  %s5 = scalar_select 0, %s4, %s2
  $region1: #{tpu_custom_call.1} parent=0
    #allocation2 [shape = 'u8[262144]{0}', space=vmem, size = 0x40000, scoped, tag = 'input window, operand 0']
    #allocation3 [shape = 's32[2]{0}', space=sflag, size = 0x8, scoped, tag = 'scoped memory for tpu_custom_call.1']
    #allocation4 [shape = 's32[2]{0}', space=sflag, size = 0x8, scoped, tag = 'scoped memory for tpu_custom_call.1']
    #allocation5 [shape = 'u8[8192]{0}', space=vmem, size = 0x2000, scoped, tag = 'output window, operand 0']
    %6 = vsyncpa [#allocation3], 0
    %s7 = scalar_lea.sflag [#allocation3], 1
    %8 = vsyncpa %s7, 0
    %9 = vsyncpa [#allocation4], 0
    %s10 = scalar_lea.sflag [#allocation4], 1
    %11 = vsyncpa %s10, 0
    loop: start=0, step=1, limit=4
    $region2: #{tpu_custom_call.1} parent=1 // loop_pre_header
      _
    $region3: #{tpu_custom_call.1} parent=1 // loop_header
      %s13 = sphi 0, %s17
      %p14 = scmp.ge.s32.totalorder %s13, 4
      %s23 = sphi 0, %s25
      %s26 = sphi 0, %s23
      %s27 = sphi 0, %s26
      %s43 = sphi 0, %s27
      %s49 = sphi 0, %s51
      %s52 = sphi 0, %s49
      %s53 = sphi 0, %s52
      %s69 = sphi 0, %s53
    $region4: #{tpu_custom_call.1} parent=1 // loop_header_branch
      %16 = sbr.rel (%p14) target = $region8
    $region5: #{tpu_custom_call.1} parent=1 // loop_body
      %s18 = ssub.s32 %s13, 1
      %s19 = ssub.s32 %s13, 2
      %s20 = sadd.s32 %s13, 1
      %s21 = ssub.s32 %s13, %s20
      %p22 = scmp.eq.s32.totalorder %s21, 0
      %s24 = sadd.s32 %s23, 1
      %s25 = scalar_select %p22, %s23, %s24
      %p28 = pneg %p22
      %p29 = scmp.eq.s32.totalorder %s13, 1
      %p30 = por %p28, %p29
      %p31 = scmp.ne.s32.totalorder %s23, %s26
      %p32 = scmp.eq.s32.totalorder %s13, 0
      %p33 = por %p31, %p32
      %p34 = scmp.ne.s32.totalorder %s23, %s26
      %p35 = scmp.eq.s32.totalorder %s18, 1
      %p36 = por %p34, %p35
      %p37 = scmp.ne.s32.totalorder %s26, %s27
      %p38 = scmp.eq.s32.totalorder %s18, 0
      %p39 = por %p37, %p38
      %p40 = scmp.ne.s32.totalorder %s26, %s27
      %p41 = scmp.eq.s32.totalorder %s19, 1
      %p42 = por %p40, %p41
      %p44 = scmp.ne.s32.totalorder %s27, %s43
      %p45 = scmp.eq.s32.totalorder %s19, 0
      %p46 = por %p44, %p45
      %s47 = ssub.s32 %s13, %s20
      %p48 = scmp.eq.s32.totalorder %s47, 0
      %s50 = sadd.s32 %s49, 1
      %s51 = scalar_select %p48, %s49, %s50
      %p54 = pneg %p48
      %p55 = scmp.eq.s32.totalorder %s13, 1
      %p56 = por %p54, %p55
      %p57 = scmp.ne.s32.totalorder %s49, %s52
      %p58 = scmp.eq.s32.totalorder %s13, 0
      %p59 = por %p57, %p58
      %p60 = scmp.ne.s32.totalorder %s49, %s52
      %p61 = scmp.eq.s32.totalorder %s18, 1
      %p62 = por %p60, %p61
      %p63 = scmp.ne.s32.totalorder %s52, %s53
      %p64 = scmp.eq.s32.totalorder %s18, 0
      %p65 = por %p63, %p64
      %p66 = scmp.ne.s32.totalorder %s52, %s53
      %p67 = scmp.eq.s32.totalorder %s19, 1
      %p68 = por %p66, %p67
      %p70 = scmp.ne.s32.totalorder %s53, %s69
      %p71 = scmp.eq.s32.totalorder %s19, 0
      %p72 = por %p70, %p71
      %p73 = scmp.le.s32.totalorder 1, %s13
      %p74 = scmp.lt.s32.totalorder %s13, 3
      %p75 = pnand %p73, %p74
      %p76 = pneg %p75
      // Predicated region
      $region9: #{tpu_custom_call.1} parent=5 // pred_check
        _
      $region10: #{tpu_custom_call.1} parent=5 // pred_check_branch
        %78 = sbr.rel (%p75) target = $region12
      $region11: #{tpu_custom_call.1} parent=5 // pred_region
        %s79 = ssub.s32 %s13, 1
      $region12: #{tpu_custom_call.1} parent=5 // pred_fallthru
        _
      %p80 = scmp.lt.s32.totalorder %s13, 2
      // Predicated region
      $region13: #{tpu_custom_call.1} parent=5 // pred_check
        %p81 = pneg %p80
      $region14: #{tpu_custom_call.1} parent=5 // pred_check_branch
        %83 = sbr.rel (%p81) target = $region16
      $region15: #{tpu_custom_call.1} parent=5 // pred_region
        // Predicated region
        $region17: #{tpu_custom_call.1} parent=15 // pred_check
          %p84 = pneg %p33
        $region18: #{tpu_custom_call.1} parent=15 // pred_check_branch
          %86 = sbr.rel (%p84) target = $region20
        $region19: #{tpu_custom_call.1} parent=15 // pred_region
          %s87 = sand.u32 %s23, 1
          %s88 = scalar_lea.sflag [#allocation3], %s87
          %s89 = sand.u32 %s23, 1
          %s90 = smul.addr %s89, 256
          %s91 = scalar_lea.vmem [#allocation2], %s90
          %s93 = ssub.s32 4096, 4096
          %94 = vsyncadd %s88, %s93
          %s95 = smul.addr %s13, 32
          %s96 = smul.addr %s95, 128
          %s97 = scalar_lea.hbm %s0, %s96
          %s98 = sshll.u32 %s91, 4
          %s99 = int_to_ptr.vmem [resolvable:$true] %s98
          %104 = dma.hbm_to_vmem [thread:$0]  %s97, 4096, %s99, %s88, 128, 128, 8
        $region20: #{tpu_custom_call.1} parent=15 // pred_fallthru
          _
      $region16: #{tpu_custom_call.1} parent=5 // pred_fallthru
        _
      %p105 = scmp.le.s32.totalorder 1, %s13
      %p106 = scmp.lt.s32.totalorder %s13, 3
      %p107 = pnand %p105, %p106
      %p108 = pneg %p107
      // Predicated region
      $region21: #{tpu_custom_call.1} parent=5 // pred_check
        _
      $region22: #{tpu_custom_call.1} parent=5 // pred_check_branch
        %110 = sbr.rel (%p107) target = $region24
      $region23: #{tpu_custom_call.1} parent=5 // pred_region
        %s111 = ssub.s32 %s13, 1
        %s112 = sand.u32 %s26, 1
        %s113 = scalar_lea.sflag [#allocation3], %s112
        %s114 = sand.u32 %s26, 1
        %s115 = smul.addr %s114, 256
        %s116 = scalar_lea.vmem [#allocation2], %s115
        // Predicated region
        $region25: #{tpu_custom_call.1} parent=23 // pred_check
          %p117 = pneg %p39
        $region26: #{tpu_custom_call.1} parent=23 // pred_check_branch
          %119 = sbr.rel (%p117) target = $region28
        $region27: #{tpu_custom_call.1} parent=23 // pred_region
          %120 = dma.done %s113, 4096
        $region28: #{tpu_custom_call.1} parent=23 // pred_fallthru
          _
        %s121 = sand.u32 %s26, 1
        %s122 = scalar_lea.sflag [#allocation3], %s121
        %s123 = sand.u32 %s26, 1
        %s124 = smul.addr %s123, 256
        %s125 = scalar_lea.vmem [#allocation2], %s124
        %p126 = pneg %p39
        %p127 = pneg %p36
        %p128 = pneg %p65
        %p129 = pneg %p62
        %s130 = sand.u32 %s52, 1
        %s131 = scalar_lea.sflag [#allocation4], %s130
        %s132 = sand.u32 %s52, 1
        %s133 = smul.addr %s132, 8
        %s134 = scalar_lea.vmem [#allocation5], %s133
        %v135 = vld [vmem:[%s116] sm:$0xff]
        %v136 = vld [vmem:[%s116 + $0x8] sm:$0xff]
        %v137 = vld [vmem:[%s116 + $0x10] sm:$0xff]
        %v138 = vld [vmem:[%s116 + $0x18] sm:$0xff]
        %v139 = vld [vmem:[%s116 + $0x20] sm:$0xff]
        %v140 = vld [vmem:[%s116 + $0x28] sm:$0xff]
        %v141 = vld [vmem:[%s116 + $0x30] sm:$0xff]
        %v142 = vld [vmem:[%s116 + $0x38] sm:$0xff]
        %v143 = vld [vmem:[%s116 + $0x40] sm:$0xff]
        %v144 = vld [vmem:[%s116 + $0x48] sm:$0xff]
        %v145 = vld [vmem:[%s116 + $0x50] sm:$0xff]
        %v146 = vld [vmem:[%s116 + $0x58] sm:$0xff]
        %v147 = vld [vmem:[%s116 + $0x60] sm:$0xff]
        %v148 = vld [vmem:[%s116 + $0x68] sm:$0xff]
        %v149 = vld [vmem:[%s116 + $0x70] sm:$0xff]
        %v150 = vld [vmem:[%s116 + $0x78] sm:$0xff]
        %v151 = vld [vmem:[%s116 + $0x80] sm:$0xff]
        %v152 = vld [vmem:[%s116 + $0x88] sm:$0xff]
        %v153 = vld [vmem:[%s116 + $0x90] sm:$0xff]
        %v154 = vld [vmem:[%s116 + $0x98] sm:$0xff]
        %v155 = vld [vmem:[%s116 + $0xa0] sm:$0xff]
        %v156 = vld [vmem:[%s116 + $0xa8] sm:$0xff]
        %v157 = vld [vmem:[%s116 + $0xb0] sm:$0xff]
        %v158 = vld [vmem:[%s116 + $0xb8] sm:$0xff]
        %v159 = vld [vmem:[%s116 + $0xc0] sm:$0xff]
        %v160 = vld [vmem:[%s116 + $0xc8] sm:$0xff]
        %v161 = vld [vmem:[%s116 + $0xd0] sm:$0xff]
        %v162 = vld [vmem:[%s116 + $0xd8] sm:$0xff]
        %v163 = vld [vmem:[%s116 + $0xe0] sm:$0xff]
        %v164 = vld [vmem:[%s116 + $0xe8] sm:$0xff]
        %v165 = vld [vmem:[%s116 + $0xf0] sm:$0xff]
        %v166 = vld [vmem:[%s116 + $0xf8] sm:$0xff]
        %v167 = vadd.f32 %v135, %v136
        %v168 = vadd.f32 %v167, %v137
        %v169 = vadd.f32 %v168, %v138
        %v170 = vadd.f32 %v169, %v139
        %v171 = vadd.f32 %v170, %v140
        %v172 = vadd.f32 %v171, %v141
        %v173 = vadd.f32 %v172, %v142
        %v174 = vadd.f32 %v173, %v143
        %v175 = vadd.f32 %v174, %v144
        %v176 = vadd.f32 %v175, %v145
        %v177 = vadd.f32 %v176, %v146
        %v178 = vadd.f32 %v177, %v147
        %v179 = vadd.f32 %v178, %v148
        %v180 = vadd.f32 %v179, %v149
        %v181 = vadd.f32 %v180, %v150
        %v182 = vadd.f32 %v181, %v151
        %v183 = vadd.f32 %v182, %v152
        %v184 = vadd.f32 %v183, %v153
        %v185 = vadd.f32 %v184, %v154
        %v186 = vadd.f32 %v185, %v155
        %v187 = vadd.f32 %v186, %v156
        %v188 = vadd.f32 %v187, %v157
        %v189 = vadd.f32 %v188, %v158
        %v190 = vadd.f32 %v189, %v159
        %v191 = vadd.f32 %v190, %v160
        %v192 = vadd.f32 %v191, %v161
        %v193 = vadd.f32 %v192, %v162
        %v194 = vadd.f32 %v193, %v163
        %v195 = vadd.f32 %v194, %v164
        %v196 = vadd.f32 %v195, %v165
        %v197 = vadd.f32 %v196, %v166
        %v198 = vrot.slane %v197, 4
        %v199 = vadd.f32 %v197, %v198
        %v200 = vrot.slane %v199, 2
        %v201 = vadd.f32 %v199, %v200
        %v202 = vrot.slane %v201, 1
        %v203 = vadd.f32 %v201, %v202
        %v204 = vmul.f32 %v135, %v135
        %v205 = vmul.f32 %v136, %v136
        %v206 = vmul.f32 %v137, %v137
        %v207 = vmul.f32 %v138, %v138
        %v208 = vmul.f32 %v139, %v139
        %v209 = vmul.f32 %v140, %v140
        %v210 = vmul.f32 %v141, %v141
        %v211 = vmul.f32 %v142, %v142
        %v212 = vmul.f32 %v143, %v143
        %v213 = vmul.f32 %v144, %v144
        %v214 = vmul.f32 %v145, %v145
        %v215 = vmul.f32 %v146, %v146
        %v216 = vmul.f32 %v147, %v147
        %v217 = vmul.f32 %v148, %v148
        %v218 = vmul.f32 %v149, %v149
        %v219 = vmul.f32 %v150, %v150
        %v220 = vmul.f32 %v151, %v151
        %v221 = vmul.f32 %v152, %v152
        %v222 = vmul.f32 %v153, %v153
        %v223 = vmul.f32 %v154, %v154
        %v224 = vmul.f32 %v155, %v155
        %v225 = vmul.f32 %v156, %v156
        %v226 = vmul.f32 %v157, %v157
        %v227 = vmul.f32 %v158, %v158
        %v228 = vmul.f32 %v159, %v159
        %v229 = vmul.f32 %v160, %v160
        %v230 = vmul.f32 %v161, %v161
        %v231 = vmul.f32 %v162, %v162
        %v232 = vmul.f32 %v163, %v163
        %v233 = vmul.f32 %v164, %v164
        %v234 = vmul.f32 %v165, %v165
        %v235 = vmul.f32 %v166, %v166
        %v236 = vadd.f32 %v204, %v205
        %v237 = vadd.f32 %v236, %v206
        %v238 = vadd.f32 %v237, %v207
        %v239 = vadd.f32 %v238, %v208
        %v240 = vadd.f32 %v239, %v209
        %v241 = vadd.f32 %v240, %v210
        %v242 = vadd.f32 %v241, %v211
        %v243 = vadd.f32 %v242, %v212
        %v244 = vadd.f32 %v243, %v213
        %v245 = vadd.f32 %v244, %v214
        %v246 = vadd.f32 %v245, %v215
        %v247 = vadd.f32 %v246, %v216
        %v248 = vadd.f32 %v247, %v217
        %v249 = vadd.f32 %v248, %v218
        %v250 = vadd.f32 %v249, %v219
        %v251 = vadd.f32 %v250, %v220
        %v252 = vadd.f32 %v251, %v221
        %v253 = vadd.f32 %v252, %v222
        %v254 = vadd.f32 %v253, %v223
        %v255 = vadd.f32 %v254, %v224
        %v256 = vadd.f32 %v255, %v225
        %v257 = vadd.f32 %v256, %v226
        %v258 = vadd.f32 %v257, %v227
        %v259 = vadd.f32 %v258, %v228
        %v260 = vadd.f32 %v259, %v229
        %v261 = vadd.f32 %v260, %v230
        %v262 = vadd.f32 %v261, %v231
        %v263 = vadd.f32 %v262, %v232
        %v264 = vadd.f32 %v263, %v233
        %v265 = vadd.f32 %v264, %v234
        %v266 = vadd.f32 %v265, %v235
        %v267 = vrot.slane %v266, 4
        %v268 = vadd.f32 %v266, %v267
        %v269 = vrot.slane %v268, 2
        %v270 = vadd.f32 %v268, %v269
        %v271 = vrot.slane %v270, 1
        %v272 = vadd.f32 %v270, %v271
        %vm273 = vcmask 1040384
        %v274 = vsel %vm273, %v203, %v272
        %vm275 = vcmask 1041408
        %v276 = vsel %vm275, %v274, 0.0
        %277 = vst [vmem:[%s134] sm:$0xff] %v276
        %s278 = sand.u32 %s52, 1
        %s279 = scalar_lea.sflag [#allocation4], %s278
        %s280 = sand.u32 %s52, 1
        %s281 = smul.addr %s280, 8
        %s282 = scalar_lea.vmem [#allocation5], %s281
        // Predicated region
        $region29: #{tpu_custom_call.1} parent=23 // pred_check
          %p283 = pneg %p62
        $region30: #{tpu_custom_call.1} parent=23 // pred_check_branch
          %285 = sbr.rel (%p283) target = $region32
        $region31: #{tpu_custom_call.1} parent=23 // pred_region
          %s287 = ssub.s32 128, 128
          %288 = vsyncadd %s279, %s287
          %s289 = smul.addr %s18, 128
          %s290 = scalar_lea.hbm %s1, %s289
          %s292 = sshll.u32 %s282, 4
          %s293 = int_to_ptr.vmem [resolvable:$true] %s292
          %295 = dma.vmem_to_hbm [thread:$0]  %s293, 128, %s290, %s279
        $region32: #{tpu_custom_call.1} parent=23 // pred_fallthru
          _
      $region24: #{tpu_custom_call.1} parent=5 // pred_fallthru
        _
      %p296 = scmp.le.s32.totalorder 2, %s13
      // Predicated region
      $region33: #{tpu_custom_call.1} parent=5 // pred_check
        %p297 = pneg %p296
      $region34: #{tpu_custom_call.1} parent=5 // pred_check_branch
        %299 = sbr.rel (%p297) target = $region36
      $region35: #{tpu_custom_call.1} parent=5 // pred_region
        %s300 = ssub.s32 %s13, 2
        // Predicated region
        $region37: #{tpu_custom_call.1} parent=35 // pred_check
          %p301 = pneg %p68
        $region38: #{tpu_custom_call.1} parent=35 // pred_check_branch
          %303 = sbr.rel (%p301) target = $region40
        $region39: #{tpu_custom_call.1} parent=35 // pred_region
          %s304 = sand.u32 %s53, 1
          %s305 = scalar_lea.sflag [#allocation4], %s304
          %s306 = sand.u32 %s53, 1
          %s307 = smul.addr %s306, 8
          %s308 = scalar_lea.vmem [#allocation5], %s307
          %309 = dma.done %s305, 128
        $region40: #{tpu_custom_call.1} parent=35 // pred_fallthru
          _
      $region36: #{tpu_custom_call.1} parent=5 // pred_fallthru
        _
    $region6: #{tpu_custom_call.1} parent=1 // loop_footer
      %s17 = sadd.s32 1, %s13
    $region7: #{tpu_custom_call.1} parent=1 // loop_footer_branch
      %12 = sbr.rel target = $region3
    $region8: #{tpu_custom_call.1} parent=1 // loop_exit
      _
    %310 = vsyncpa [#allocation3], 1
    %s311 = scalar_lea.sflag [#allocation3], 1
    %312 = vsyncpa %s311, 1
    %313 = vsyncpa [#allocation4], 1
    %s314 = scalar_lea.sflag [#allocation4], 1
    %315 = vsyncpa %s314, 1

</llo_original>
